<compile_context>
chip_gen: v5e
topology: v5e:2x2
jax: 0.10.0
libtpu: 0.0.40
codegen_flags: <defaults>
</compile_context>

<pallas_src>
import functools

import jax
import jax.numpy as jnp
from jax.experimental import pallas as pl
from jax.experimental.pallas import tpu as pltpu

NEG_SLOPE = 0.01   # PyTorch nn.LeakyReLU default
BN_EPS = 1e-5      # PyTorch nn.BatchNorm1d default


def _leaky_relu(x):
    # Valid for 0 < NEG_SLOPE < 1: max(x, a*x) == leaky_relu(x).
    return jnp.maximum(x, NEG_SLOPE * x)


def binary_fcnn_kernel(x_ref, w1_ref, b1_ref, w2_ref, b2_ref, w3_ref, b3_ref,
                       o_ref, *, chunk, epi_dtype):
    """Feature-major fused forward over register-resident batch sub-chunks.

    x_ref  : [tile_b, F] f32 (native row-major layout; one contiguous DMA)
    w1_ref : [64, F]  mxu dtype               b1_ref : [64, 1] f32
    w2_ref : [32, 64] mxu dtype (bn1 folded)  b2_ref : [32, 1] f32 (bn1 folded)
    w3_ref : [32, 1]  f32 (bn2 folded)        b3_ref : [1, 1]  f32 (bn2 folded)
    o_ref  : [1, tile_b] f32 (lane-dense)
    """
    mxu_dtype = w1_ref.dtype

    # Hoist weight/bias loads + casts out of the chunk loop (JAX doesn't CSE
    # broadcasts/casts inside loops).
    w1 = w1_ref[...]
    w2 = w2_ref[...]
    b1 = b1_ref[...].astype(epi_dtype)
    b2 = b2_ref[...].astype(epi_dtype)
    w3 = w3_ref[...].astype(epi_dtype)
    b3 = b3_ref[...]                                             # [1, 1] f32

    tile_b = o_ref.shape[1]
    # Fully-unrolled inner loop over batch sub-chunks: h1/h2 stay in vregs
    # instead of materializing tile-wide intermediates in VMEM.
    for c0 in range(0, tile_b, chunk):
        # In-kernel "transpose" + cast: contract F of both operands on the MXU.
        x_c = x_ref[c0:c0 + chunk, :].astype(mxu_dtype)          # [C, F]

        # ---- fc1 + LeakyReLU (MXU: M=64, K=F, N=C; f32 accumulate) ---------
        h1 = jax.lax.dot_general(w1, x_c, (((1,), (1,)), ((), ())),
                                 preferred_element_type=jnp.float32)
        h1 = _leaky_relu(h1.astype(epi_dtype) + b1)              # [64, C]
        # (bn1 folded into w2/b2; dropout = identity in eval mode)

        # ---- fc2(+bn1) + LeakyReLU (MXU: M=32, K=64, N=C) ------------------
        h2 = jnp.dot(w2, h1.astype(mxu_dtype),
                     preferred_element_type=jnp.float32)
        h2 = _leaky_relu(h2.astype(epi_dtype) + b2)              # [32, C]
        # (bn2 folded into w3/b3; dropout = identity in eval mode)

        # ---- fc3(+bn2) + sigmoid: broadcast-mul + sublane reduce (no N=1 MXU)
        h3 = jnp.sum(h2 * w3, axis=0, keepdims=True,
                     dtype=jnp.float32) + b3                     # [1, C]
        o_ref[:, c0:c0 + chunk] = jax.nn.sigmoid(h3)


def _fold_bn_into_next(w_next, b_next, gamma, beta, mean, var):
    """Fold eval-mode BN (y = s*x + t) into the linear layer that consumes it.

    next(bn(h)) = W (s*h + t) + b = (W * s[None, :]) h + (W @ t + b)
    """
    s = gamma * jax.lax.rsqrt(var + BN_EPS)
    t = beta - mean * s
    w_f = w_next * s[None, :]
    b_f = b_next + jnp.dot(w_next, t, precision=jax.lax.Precision.HIGHEST)
    return w_f, b_f


def _pick_tiles(B, F, tile_b):
    """Static (trace-time) batch-tile and sub-chunk selection."""
    if B <= 128:
        tile = B                         # one small block; dims == full array
    else:
        # Lane-aligned, never exceeding B (last grid block may be partial).
        tile = max(128, min(tile_b, (B // 128) * 128))
        # Keep the double-buffered x window (2 * tile * F * 4 B) well inside
        # v7x's 32 MiB scoped-VMEM default.
        max_tile = max(128, (8 * 1024 * 1024 // (F * 4)) // 128 * 128)
        tile = min(tile, max_tile)
        # v7x megacore: keep >= 2 grid steps so ("parallel",) spans both TCs.
        if pl.cdiv(B, tile) < 2:
            tile = max(128, ((B // 2) // 128) * 128)
    # Register-resident sub-chunk of the tile (128/256 columns).
    chunk = min(256, tile)
    while tile % chunk:
        chunk //= 2
    return tile, chunk


@functools.partial(jax.jit,
                   static_argnames=("tile_b", "mxu_dtype", "epi_dtype"))
def binary_fcnn_forward(x, params, *, tile_b=16384,
                        mxu_dtype=jnp.bfloat16, epi_dtype=jnp.bfloat16):
    """x: [B, input_size] f32.  Returns [B, 1] f32 (eval-mode forward).

    mxu_dtype: dtype of x / fc1 / fc2 operands fed to the MXU (bf16 on all
               generations; f32 only for parity checking).
    epi_dtype: dtype of the bias-add + LeakyReLU epilogues (bf16 on v6e/v7x;
               pass jnp.float32 on v5e, whose VPU has no bf16 support).
    """
    B, F = x.shape
    tile, chunk = _pick_tiles(B, F, tile_b)
    n_steps = pl.cdiv(B, tile)

    # ---- fold BN into the following linear layers (trace-time, zero kernel cost)
    w2f, b2f = _fold_bn_into_next(params["w2"], params["b2"],
                                  params["bn1_gamma"], params["bn1_beta"],
                                  params["bn1_mean"], params["bn1_var"])
    w3f, b3f = _fold_bn_into_next(params["w3"], params["b3"],
                                  params["bn2_gamma"], params["bn2_beta"],
                                  params["bn2_mean"], params["bn2_var"])

    w1_c = params["w1"].astype(mxu_dtype)                        # [64, F]
    w2_c = w2f.astype(mxu_dtype)                                 # [32, 64]
    b1_c = params["b1"].reshape(64, 1).astype(jnp.float32)
    b2_c = b2f.reshape(32, 1).astype(jnp.float32)
    w3_c = w3f.reshape(32, 1).astype(jnp.float32)                # tiny; VPU path
    b3_c = b3f.reshape(1, 1).astype(jnp.float32)

    const = lambda i: (0, 0)    # weights/biases: VMEM-resident across steps
    kernel = functools.partial(binary_fcnn_kernel, chunk=chunk,
                               epi_dtype=epi_dtype)

    out = pl.pallas_call(
        kernel,
        out_shape=jax.ShapeDtypeStruct((1, n_steps * tile), jnp.float32),
        grid=(n_steps,),
        in_specs=[
            pl.BlockSpec((tile, F), lambda i: (i, 0)),   # x, native layout
            pl.BlockSpec((64, F), const),
            pl.BlockSpec((64, 1), const),
            pl.BlockSpec((32, 64), const),
            pl.BlockSpec((32, 1), const),
            pl.BlockSpec((32, 1), const),
            pl.BlockSpec((1, 1), const),
        ],
        out_specs=pl.BlockSpec((1, tile), lambda i: (0, i)),
        compiler_params=pltpu.CompilerParams(
            dimension_semantics=("parallel",)),          # v7x: shard over 2 TCs
    )(x, w1_c, b1_c, w2_c, b2_c, w3_c, b3_c)

    return out[0, :B].reshape(B, 1)


def init_params(key, input_size):
    """PyTorch-convention parameters: Linear weights [out, in], biases [out].

    BN running stats / affine params get non-trivial values so the BN-folding
    path is actually exercised by the correctness check.
    """
    dims = [(input_size, 64), (64, 32), (32, 1)]
    params = {}
    keys = jax.random.split(key, 14)
    ki = 0
    for i, (fan_in, fan_out) in enumerate(dims, start=1):
        bound = 1.0 / (fan_in ** 0.5)
        params[f"w{i}"] = jax.random.uniform(
            keys[ki], (fan_out, fan_in), jnp.float32, -bound, bound); ki += 1
        params[f"b{i}"] = jax.random.uniform(
            keys[ki], (fan_out,), jnp.float32, -bound, bound); ki += 1
    for name, width in (("bn1", 64), ("bn2", 32)):
        params[f"{name}_gamma"] = jax.random.uniform(
            keys[ki], (width,), jnp.float32, 0.5, 1.5); ki += 1
        params[f"{name}_beta"] = 0.1 * jax.random.normal(
            keys[ki], (width,), jnp.float32); ki += 1
        params[f"{name}_mean"] = 0.1 * jax.random.normal(
            keys[ki], (width,), jnp.float32); ki += 1
        params[f"{name}_var"] = jax.random.uniform(
            keys[ki], (width,), jnp.float32, 0.5, 1.5); ki += 1
    return params


def reference_forward(x, params):
    """Pure-JAX eval-mode reference with the original PyTorch op order."""
    p = jax.lax.Precision.HIGHEST
    h = _leaky_relu(jnp.dot(x, params["w1"].T, precision=p) + params["b1"])
    s1 = params["bn1_gamma"] * jax.lax.rsqrt(params["bn1_var"] + BN_EPS)
    h = (h - params["bn1_mean"]) * s1 + params["bn1_beta"]
    h = _leaky_relu(jnp.dot(h, params["w2"].T, precision=p) + params["b2"])
    s2 = params["bn2_gamma"] * jax.lax.rsqrt(params["bn2_var"] + BN_EPS)
    h = (h - params["bn2_mean"]) * s2 + params["bn2_beta"]
    return jax.nn.sigmoid(jnp.dot(h, params["w3"].T, precision=p) + params["b3"])


if __name__ == "__main__":
    key = jax.random.PRNGKey(0)
    k_x, k_p = jax.random.split(key)

    batch, input_size = 8, 32
    x = jax.random.normal(k_x, (batch, input_size), jnp.float32)
    params = init_params(k_p, input_size)

    # f32 path: parity check of layout / BN folding / fc3 reduction
    # (MXU default precision inside the kernel, hence the 2e-3 tolerance).
    out_f32 = jax.block_until_ready(
        binary_fcnn_forward(x, params, mxu_dtype=jnp.float32,
                            epi_dtype=jnp.float32))
    # bf16 path: the fast v6e/v7x configuration (f32 MXU accumulation).
    out_bf16 = jax.block_until_ready(binary_fcnn_forward(x, params))

    ref = reference_forward(x, params)
    assert out_f32.shape == (batch, 1) and out_bf16.shape == (batch, 1)
    assert jnp.allclose(out_f32, ref, atol=2e-3, rtol=2e-3), (
        f"f32 max err {jnp.max(jnp.abs(out_f32 - ref))}")
    assert jnp.allclose(out_bf16, ref, atol=3e-2, rtol=3e-2), (
        f"bf16 max err {jnp.max(jnp.abs(out_bf16 - ref))}")

    print("KERNEL_OK")
</pallas_src>

<mosaic_0001>
module attributes {stable_mosaic.version = 11 : i64} {
  func.func @binary_fcnn_kernel(%arg0: i32, %arg1: memref<8x32xf32, #tpu.memory_space<vmem>>, %arg2: memref<64x32xf32, #tpu.memory_space<vmem>>, %arg3: memref<64x1xf32, #tpu.memory_space<vmem>>, %arg4: memref<32x64xf32, #tpu.memory_space<vmem>>, %arg5: memref<32x1xf32, #tpu.memory_space<vmem>>, %arg6: memref<32x1xf32, #tpu.memory_space<vmem>>, %arg7: memref<1x1xf32, #tpu.memory_space<vmem>>, %arg8: memref<1x8xf32, #tpu.memory_space<vmem>>) attributes {dimension_semantics = [#tpu.dimension_semantics<parallel>], iteration_bounds = array<i64: 1>, scalar_prefetch = 0 : i64, scratch_operands = 0 : i64, tpu.core_type = #tpu.core_type<tc>, window_params = [{transform_indices = @transform_0, window_bounds = array<i64: 8, 32>}, {pipeline_mode = #tpu.pipeline_mode<synchronous>, transform_indices = @transform_1, window_bounds = array<i64: 64, 32>}, {pipeline_mode = #tpu.pipeline_mode<synchronous>, transform_indices = @transform_2, window_bounds = array<i64: 64, 1>}, {pipeline_mode = #tpu.pipeline_mode<synchronous>, transform_indices = @transform_3, window_bounds = array<i64: 32, 64>}, {pipeline_mode = #tpu.pipeline_mode<synchronous>, transform_indices = @transform_4, window_bounds = array<i64: 32, 1>}, {pipeline_mode = #tpu.pipeline_mode<synchronous>, transform_indices = @transform_5, window_bounds = array<i64: 32, 1>}, {pipeline_mode = #tpu.pipeline_mode<synchronous>, transform_indices = @transform_6, window_bounds = array<i64: 1, 1>}, {transform_indices = @transform_7, window_bounds = array<i64: 1, 8>}]} {
    %c0 = arith.constant 0 : index
    %c0_0 = arith.constant 0 : index
    %0 = vector.load %arg2[%c0, %c0_0] : memref<64x32xf32, #tpu.memory_space<vmem>>, vector<64x32xf32>
    %c0_1 = arith.constant 0 : index
    %c0_2 = arith.constant 0 : index
    %1 = vector.load %arg4[%c0_1, %c0_2] : memref<32x64xf32, #tpu.memory_space<vmem>>, vector<32x64xf32>
    %c0_3 = arith.constant 0 : index
    %c0_4 = arith.constant 0 : index
    %2 = vector.load %arg3[%c0_3, %c0_4] : memref<64x1xf32, #tpu.memory_space<vmem>>, vector<64x1xf32>
    %c0_5 = arith.constant 0 : index
    %c0_6 = arith.constant 0 : index
    %3 = vector.load %arg5[%c0_5, %c0_6] : memref<32x1xf32, #tpu.memory_space<vmem>>, vector<32x1xf32>
    %c0_7 = arith.constant 0 : index
    %c0_8 = arith.constant 0 : index
    %4 = vector.load %arg6[%c0_7, %c0_8] : memref<32x1xf32, #tpu.memory_space<vmem>>, vector<32x1xf32>
    %c0_9 = arith.constant 0 : index
    %c0_10 = arith.constant 0 : index
    %5 = vector.load %arg7[%c0_9, %c0_10] : memref<1x1xf32, #tpu.memory_space<vmem>>, vector<1x1xf32>
    %c0_11 = arith.constant 0 : index
    %c0_12 = arith.constant 0 : index
    %6 = vector.load %arg1[%c0_11, %c0_12] : memref<8x32xf32, #tpu.memory_space<vmem>>, vector<8x32xf32>
    %cst = arith.constant dense<0.000000e+00> : vector<64x8xf32>
    %7 = tpu.matmul %0, %6, %cst {dimension_numbers = #tpu.dot_dimension_numbers<[1], [1], [0], [0], [0, 0, 1, 0], [], []>} : vector<64x32xf32>, vector<8x32xf32>, vector<64x8xf32> -> vector<64x8xf32>
    %8 = vector.broadcast %2 : vector<64x1xf32> to vector<64x8xf32>
    %9 = arith.addf %7, %8 : vector<64x8xf32>
    %cst_13 = arith.constant 0.00999999977 : f32
    %10 = vector.broadcast %cst_13 : f32 to vector<64x8xf32>
    %11 = arith.mulf %10, %9 : vector<64x8xf32>
    %12 = arith.maximumf %9, %11 : vector<64x8xf32>
    %cst_14 = arith.constant dense<0.000000e+00> : vector<32x8xf32>
    %13 = tpu.matmul %1, %12, %cst_14 {dimension_numbers = #tpu.dot_dimension_numbers<[1], [0], [0], [1], [0, 0, 1, 1], [], []>} : vector<32x64xf32>, vector<64x8xf32>, vector<32x8xf32> -> vector<32x8xf32>
    %14 = vector.broadcast %3 : vector<32x1xf32> to vector<32x8xf32>
    %15 = arith.addf %13, %14 : vector<32x8xf32>
    %cst_15 = arith.constant 0.00999999977 : f32
    %16 = vector.broadcast %cst_15 : f32 to vector<32x8xf32>
    %17 = arith.mulf %16, %15 : vector<32x8xf32>
    %18 = arith.maximumf %15, %17 : vector<32x8xf32>
    %19 = vector.broadcast %4 : vector<32x1xf32> to vector<32x8xf32>
    %20 = arith.mulf %18, %19 : vector<32x8xf32>
    %cst_16 = arith.constant dense<0.000000e+00> : vector<8xf32>
    %21 = vector.multi_reduction <add>, %20, %cst_16 [0] : vector<32x8xf32> to vector<8xf32>
    %22 = vector.shape_cast %21 : vector<8xf32> to vector<1x8xf32>
    %23 = vector.broadcast %5 : vector<1x1xf32> to vector<1x8xf32>
    %24 = arith.addf %22, %23 : vector<1x8xf32>
    %25 = arith.negf %24 : vector<1x8xf32>
    %26 = math.exp %25 : vector<1x8xf32>
    %cst_17 = arith.constant 1.000000e+00 : f32
    %27 = vector.broadcast %cst_17 : f32 to vector<1x8xf32>
    %28 = arith.addf %27, %26 : vector<1x8xf32>
    %29 = arith.divf %27, %28 : vector<1x8xf32>
    %c0_18 = arith.constant 0 : index
    %c0_19 = arith.constant 0 : index
    %30 = vector.load %arg8[%c0_18, %c0_19] : memref<1x8xf32, #tpu.memory_space<vmem>>, vector<1x8xf32>
    tpu.vector_store %arg8[%c0_18, %c0_19], %29 {strides = array<i32>} : memref<1x8xf32, #tpu.memory_space<vmem>>, vector<1x8xf32>,
    return
  }
  func.func @transform_0(%arg0: i32) -> (i32, i32) {
    %c0_i32 = arith.constant 0 : i32
    %c0_i32_0 = arith.constant 0 : i32
    return %arg0, %c0_i32 : i32, i32
  }
  func.func @transform_1(%arg0: i32) -> (i32, i32) {
    %c0_i32 = arith.constant 0 : i32
    %c0_i32_0 = arith.constant 0 : i32
    %c0_i32_1 = arith.constant 0 : i32
    return %c0_i32, %c0_i32_0 : i32, i32
  }
  func.func @transform_2(%arg0: i32) -> (i32, i32) {
    %c0_i32 = arith.constant 0 : i32
    %c0_i32_0 = arith.constant 0 : i32
    %c0_i32_1 = arith.constant 0 : i32
    return %c0_i32, %c0_i32_0 : i32, i32
  }
  func.func @transform_3(%arg0: i32) -> (i32, i32) {
    %c0_i32 = arith.constant 0 : i32
    %c0_i32_0 = arith.constant 0 : i32
    %c0_i32_1 = arith.constant 0 : i32
    return %c0_i32, %c0_i32_0 : i32, i32
  }
  func.func @transform_4(%arg0: i32) -> (i32, i32) {
    %c0_i32 = arith.constant 0 : i32
    %c0_i32_0 = arith.constant 0 : i32
    %c0_i32_1 = arith.constant 0 : i32
    return %c0_i32, %c0_i32_0 : i32, i32
  }
  func.func @transform_5(%arg0: i32) -> (i32, i32) {
    %c0_i32 = arith.constant 0 : i32
    %c0_i32_0 = arith.constant 0 : i32
    %c0_i32_1 = arith.constant 0 : i32
    return %c0_i32, %c0_i32_0 : i32, i32
  }
  func.func @transform_6(%arg0: i32) -> (i32, i32) {
    %c0_i32 = arith.constant 0 : i32
    %c0_i32_0 = arith.constant 0 : i32
    %c0_i32_1 = arith.constant 0 : i32
    return %c0_i32, %c0_i32_0 : i32, i32
  }
  func.func @transform_7(%arg0: i32) -> (i32, i32) {
    %c0_i32 = arith.constant 0 : i32
    %c0_i32_0 = arith.constant 0 : i32
    return %c0_i32, %arg0 : i32, i32
  }
}

</mosaic_0001>

<llo_original>
// kernel: binary_fcnn_forward.1
$region0: #{binary_fcnn_forward.1}
  #allocation0 [shape = 'u32[]', space=smem, size = 0x4, offset = 0x4, fixed_abs, tag = 'smem constant byte address 0x4 - core index']
  #allocation1 [shape = 'u32[72,128]{1,0:T(1,128)}', space=vmem, size = 0x9000, scoped, tag = 'internal scratch']
  #allocation2 [shape = 'f32[1,1]{1,0:T(1,128)S(1)}', space=vmem, size = 0x200, scoped, tag = 'scoped memory for binary_fcnn_forward.1']
  %s0 = inlined_call_operand.vmem [shape: f32[8,32], index: 0, kind: input, shape index: {}]
  %s1 = inlined_call_operand.vmem [shape: f32[64,32], index: 1, kind: input, shape index: {}]
  %s2 = inlined_call_operand.vmem [shape: f32[64,1], index: 2, kind: input, shape index: {}]
  %s3 = inlined_call_operand.vmem [shape: f32[32,64], index: 3, kind: input, shape index: {}]
  %s4 = inlined_call_operand.vmem [shape: f32[32,1], index: 4, kind: input, shape index: {}]
  %s5 = inlined_call_operand.vmem [shape: f32[32,1], index: 5, kind: input, shape index: {}]
  %s6 = inlined_call_operand.<no memory space> [shape: f32[1,1], index: 6, kind: input, shape index: {}]
  %s7 = inlined_call_operand.hbm [shape: f32[1,8], index: 7, kind: output, shape index: {}]
  %s8 = sld [smem:[#allocation0]]
  $region38: #{binary_fcnn_forward.1} parent=0
    _
  %s10 = ssub.s32 1, %s8
  %s11 = scalar_select 0, %s10, %s8
  %v12 = vstv %s6
  %13 = vst [vmem:[#allocation2] sm:$0x1] %v12
  $region1: #{binary_fcnn_forward.1} parent=0
    #allocation3 [shape = 'u8[512]{0}', space=vmem, size = 0x400, scoped, tag = 'output window, operand 0, single buffered']
    #allocation4 [shape = 's32[1]{0}', space=sflag, size = 0x4, scoped, tag = 'scoped memory for binary_fcnn_forward.1']
    %14 = vsyncpa [#allocation4], 0
    // Predicated region
    $region2: #{binary_fcnn_forward.1} parent=1 // pred_check
      _
    $region3: #{binary_fcnn_forward.1} parent=1 // pred_check_branch
      %16 = sbr.rel (0) target = $region5
    $region4: #{binary_fcnn_forward.1} parent=1 // pred_region
      _
    $region5: #{binary_fcnn_forward.1} parent=1 // pred_fallthru
      _
    // Predicated region
    $region6: #{binary_fcnn_forward.1} parent=1 // pred_check
      _
    $region7: #{binary_fcnn_forward.1} parent=1 // pred_check_branch
      %18 = sbr.rel (0) target = $region9
    $region8: #{binary_fcnn_forward.1} parent=1 // pred_region
      _
    $region9: #{binary_fcnn_forward.1} parent=1 // pred_fallthru
      _
    // Predicated region
    $region10: #{binary_fcnn_forward.1} parent=1 // pred_check
      _
    $region11: #{binary_fcnn_forward.1} parent=1 // pred_check_branch
      %20 = sbr.rel (0) target = $region13
    $region12: #{binary_fcnn_forward.1} parent=1 // pred_region
      _
    $region13: #{binary_fcnn_forward.1} parent=1 // pred_fallthru
      _
    // Predicated region
    $region14: #{binary_fcnn_forward.1} parent=1 // pred_check
      _
    $region15: #{binary_fcnn_forward.1} parent=1 // pred_check_branch
      %22 = sbr.rel (0) target = $region17
    $region16: #{binary_fcnn_forward.1} parent=1 // pred_region
      _
    $region17: #{binary_fcnn_forward.1} parent=1 // pred_fallthru
      _
    // Predicated region
    $region18: #{binary_fcnn_forward.1} parent=1 // pred_check
      _
    $region19: #{binary_fcnn_forward.1} parent=1 // pred_check_branch
      %24 = sbr.rel (0) target = $region21
    $region20: #{binary_fcnn_forward.1} parent=1 // pred_region
      _
    $region21: #{binary_fcnn_forward.1} parent=1 // pred_fallthru
      _
    // Predicated region
    $region22: #{binary_fcnn_forward.1} parent=1 // pred_check
      _
    $region23: #{binary_fcnn_forward.1} parent=1 // pred_check_branch
      %26 = sbr.rel (0) target = $region25
    $region24: #{binary_fcnn_forward.1} parent=1 // pred_region
      _
    $region25: #{binary_fcnn_forward.1} parent=1 // pred_fallthru
      _
    // Predicated region
    $region26: #{binary_fcnn_forward.1} parent=1 // pred_check
      _
    $region27: #{binary_fcnn_forward.1} parent=1 // pred_check_branch
      %28 = sbr.rel (0) target = $region29
    $region28: #{binary_fcnn_forward.1} parent=1 // pred_region
      _
    $region29: #{binary_fcnn_forward.1} parent=1 // pred_fallthru
      _
    %v29 = vld [vmem:[%s1] sm:$0xff]
    %v30 = vld [vmem:[%s1 + $0x8] sm:$0xff]
    %v31 = vld [vmem:[%s1 + $0x10] sm:$0xff]
    %v32 = vld [vmem:[%s1 + $0x18] sm:$0xff]
    %v33 = vld [vmem:[%s1 + $0x20] sm:$0xff]
    %v34 = vld [vmem:[%s1 + $0x28] sm:$0xff]
    %v35 = vld [vmem:[%s1 + $0x30] sm:$0xff]
    %v36 = vld [vmem:[%s1 + $0x38] sm:$0xff]
    %v37 = vld [vmem:[%s3] sm:$0xff]
    %v38 = vld [vmem:[%s3 + $0x8] sm:$0xff]
    %v39 = vld [vmem:[%s3 + $0x10] sm:$0xff]
    %v40 = vld [vmem:[%s3 + $0x18] sm:$0xff]
    %v41 = vld [vmem:[%s2] sm:$0xff]
    %v42 = vld [vmem:[%s2 + $0x8] sm:$0xff]
    %v43 = vld [vmem:[%s2 + $0x10] sm:$0xff]
    %v44 = vld [vmem:[%s2 + $0x18] sm:$0xff]
    %v45 = vld [vmem:[%s2 + $0x20] sm:$0xff]
    %v46 = vld [vmem:[%s2 + $0x28] sm:$0xff]
    %v47 = vld [vmem:[%s2 + $0x30] sm:$0xff]
    %v48 = vld [vmem:[%s2 + $0x38] sm:$0xff]
    %v49 = vld [vmem:[%s4] sm:$0xff]
    %v50 = vld [vmem:[%s4 + $0x8] sm:$0xff]
    %v51 = vld [vmem:[%s4 + $0x10] sm:$0xff]
    %v52 = vld [vmem:[%s4 + $0x18] sm:$0xff]
    %v53 = vld [vmem:[%s5] sm:$0xff]
    %v54 = vld [vmem:[%s5 + $0x8] sm:$0xff]
    %v55 = vld [vmem:[%s5 + $0x10] sm:$0xff]
    %v56 = vld [vmem:[%s5 + $0x18] sm:$0xff]
    %v57 = vld [vmem:[#allocation2] sm:$0x1]
    %v58 = vld [vmem:[%s0] sm:$0xff]
    %60 = vset.pattern.permute.xlu0 0
    %61 = vperm.xlu0 %60, %v41
    %v62 = vpop.permute.xlu0 %61
    %65 = vset.pattern.permute.xlu0 0
    %66 = vperm.xlu0 %65, %v42
    %v67 = vpop.permute.xlu0 %66
    %70 = vset.pattern.permute.xlu0 0
    %71 = vperm.xlu0 %70, %v43
    %v72 = vpop.permute.xlu0 %71
    %75 = vset.pattern.permute.xlu0 0
    %76 = vperm.xlu0 %75, %v44
    %v77 = vpop.permute.xlu0 %76
    %80 = vset.pattern.permute.xlu0 0
    %81 = vperm.xlu0 %80, %v45
    %v82 = vpop.permute.xlu0 %81
    %85 = vset.pattern.permute.xlu0 0
    %86 = vperm.xlu0 %85, %v46
    %v87 = vpop.permute.xlu0 %86
    %90 = vset.pattern.permute.xlu0 0
    %91 = vperm.xlu0 %90, %v47
    %v92 = vpop.permute.xlu0 %91
    %95 = vset.pattern.permute.xlu0 0
    %96 = vperm.xlu0 %95, %v48
    %v97 = vpop.permute.xlu0 %96
    %vm99 = vcmask 261120
    %v101 = vsel %vm99, %v29, 0
    %v104 = vsel %vm99, %v30, 0
    %v107 = vsel %vm99, %v31, 0
    %v110 = vsel %vm99, %v32, 0
    %v113 = vsel %vm99, %v33, 0
    %v116 = vsel %vm99, %v34, 0
    %v119 = vsel %vm99, %v35, 0
    %v122 = vsel %vm99, %v36, 0
    %v125 = vsel %vm99, %v58, 0
    %127 = vmatpush.xpose.msra.mxu0 0.0
    %128 = vmatpush.xpose.msra.mxu0 0.0
    %129 = vmatpush.xpose.msra.mxu0 0.0
    %130 = vmatpush.xpose.msra.mxu0 0.0
    %131 = vmatpush.xpose.msra.mxu0 0.0
    %132 = vmatpush.xpose.msra.mxu0 0.0
    %133 = vmatpush.xpose.msra.mxu0 0.0
    %134 = vmatpush.xpose.msra.mxu0 0.0
    %135 = vmatpush.xpose.msra.mxu0 0.0
    %136 = vmatpush.xpose.msra.mxu0 0.0
    %137 = vmatpush.xpose.msra.mxu0 0.0
    %138 = vmatpush.xpose.msra.mxu0 0.0
    %139 = vmatpush.xpose.msra.mxu0 0.0
    %140 = vmatpush.xpose.msra.mxu0 0.0
    %141 = vmatpush.xpose.msra.mxu0 0.0
    %142 = vmatpush.xpose.msra.mxu0 %v125
    %143 = vmatmul.f32.gmra.mxu0 %v101
    %v144 = vpop.f32.mrf.mxu0
    %v145 = vadd.f32 %v62, %v144
    %146 = vmatmul.f32.gmra.mxu0 %v104
    %v147 = vpop.f32.mrf.mxu0
    %v148 = vadd.f32 %v67, %v147
    %149 = vmatmul.f32.gmra.mxu0 %v107
    %v150 = vpop.f32.mrf.mxu0
    %v151 = vadd.f32 %v72, %v150
    %152 = vmatmul.f32.gmra.mxu0 %v110
    %v153 = vpop.f32.mrf.mxu0
    %v154 = vadd.f32 %v77, %v153
    %155 = vmatmul.f32.gmra.mxu0 %v113
    %v156 = vpop.f32.mrf.mxu0
    %v157 = vadd.f32 %v82, %v156
    %158 = vmatmul.f32.gmra.mxu0 %v116
    %v159 = vpop.f32.mrf.mxu0
    %v160 = vadd.f32 %v87, %v159
    %161 = vmatmul.f32.gmra.mxu0 %v119
    %v162 = vpop.f32.mrf.mxu0
    %v163 = vadd.f32 %v92, %v162
    %164 = vmatmul.f32.gmra.mxu0 %v122
    %v165 = vpop.f32.mrf.mxu0
    %v166 = vadd.f32 %v97, %v165
    %167 = vdwg.mxu0
    %v168 = vmul.f32 %v145, 0.01
    %v169 = vmul.f32 %v148, 0.01
    %v170 = vmul.f32 %v151, 0.01
    %v171 = vmul.f32 %v154, 0.01
    %v172 = vmul.f32 %v157, 0.01
    %v173 = vmul.f32 %v160, 0.01
    %v174 = vmul.f32 %v163, 0.01
    %v175 = vmul.f32 %v166, 0.01
    %v176 = vmax.f32 %v145, %v168
    %v177 = vmax.f32 %v148, %v169
    %v178 = vmax.f32 %v151, %v170
    %v179 = vmax.f32 %v154, %v171
    %v180 = vmax.f32 %v157, %v172
    %v181 = vmax.f32 %v160, %v173
    %v182 = vmax.f32 %v163, %v174
    %v183 = vmax.f32 %v166, %v175
    %185 = vset.pattern.permute.xlu0 0
    %186 = vperm.xlu0 %185, %v49
    %v187 = vpop.permute.xlu0 %186
    %190 = vset.pattern.permute.xlu0 0
    %191 = vperm.xlu0 %190, %v50
    %v192 = vpop.permute.xlu0 %191
    %195 = vset.pattern.permute.xlu0 0
    %196 = vperm.xlu0 %195, %v51
    %v197 = vpop.permute.xlu0 %196
    %200 = vset.pattern.permute.xlu0 0
    %201 = vperm.xlu0 %200, %v52
    %v202 = vpop.permute.xlu0 %201
    %vm204 = vcmask 523264
    %v206 = vsel %vm204, %v37, 0
    %v209 = vsel %vm204, %v38, 0
    %v212 = vsel %vm204, %v39, 0
    %v215 = vsel %vm204, %v40, 0
    %217 = vmatpush.msra.mxu0 0.0
    %218 = vmatpush.msra.mxu0 0.0
    %219 = vmatpush.msra.mxu0 0.0
    %220 = vmatpush.msra.mxu0 0.0
    %221 = vmatpush.msra.mxu0 0.0
    %222 = vmatpush.msra.mxu0 0.0
    %223 = vmatpush.msra.mxu0 0.0
    %224 = vmatpush.msra.mxu0 0.0
    %225 = vmatpush.msra.mxu0 %v183
    %226 = vmatpush.msra.mxu0 %v182
    %227 = vmatpush.msra.mxu0 %v181
    %228 = vmatpush.msra.mxu0 %v180
    %229 = vmatpush.msra.mxu0 %v179
    %230 = vmatpush.msra.mxu0 %v178
    %231 = vmatpush.msra.mxu0 %v177
    %232 = vmatpush.msra.mxu0 %v176
    %233 = vmatmul.f32.gmra.mxu0 %v206
    %v234 = vpop.f32.mrf.mxu0
    %v235 = vadd.f32 %v187, %v234
    %236 = vmatmul.f32.gmra.mxu0 %v209
    %v237 = vpop.f32.mrf.mxu0
    %v238 = vadd.f32 %v192, %v237
    %239 = vmatmul.f32.gmra.mxu0 %v212
    %v240 = vpop.f32.mrf.mxu0
    %v241 = vadd.f32 %v197, %v240
    %242 = vmatmul.f32.gmra.mxu0 %v215
    %v243 = vpop.f32.mrf.mxu0
    %v244 = vadd.f32 %v202, %v243
    %245 = vdwg.mxu0
    %v246 = vmul.f32 %v235, 0.01
    %v247 = vmul.f32 %v238, 0.01
    %v248 = vmul.f32 %v241, 0.01
    %v249 = vmul.f32 %v244, 0.01
    %v250 = vmax.f32 %v235, %v246
    %v251 = vmax.f32 %v238, %v247
    %v252 = vmax.f32 %v241, %v248
    %v253 = vmax.f32 %v244, %v249
    %255 = vset.pattern.permute.xlu0 0
    %256 = vperm.xlu0 %255, %v53
    %v257 = vpop.permute.xlu0 %256
    %260 = vset.pattern.permute.xlu0 0
    %261 = vperm.xlu0 %260, %v54
    %v262 = vpop.permute.xlu0 %261
    %265 = vset.pattern.permute.xlu0 0
    %266 = vperm.xlu0 %265, %v55
    %v267 = vpop.permute.xlu0 %266
    %270 = vset.pattern.permute.xlu0 0
    %271 = vperm.xlu0 %270, %v56
    %v272 = vpop.permute.xlu0 %271
    %v274 = vmul.f32 %v250, %v257
    %v275 = vmul.f32 %v251, %v262
    %v276 = vmul.f32 %v252, %v267
    %v277 = vmul.f32 %v253, %v272
    %vm278 = vcmask 64512
    %v279 = vsel %vm278, %v274, 0.0
    %v280 = vsel %vm278, %v275, 0.0
    %v281 = vadd.f32 %v279, %v280
    %v282 = vsel %vm278, %v276, 0.0
    %v283 = vadd.f32 %v281, %v282
    %v284 = vsel %vm278, %v277, 0.0
    %v285 = vadd.f32 %v283, %v284
    %v286 = vrot.slane %v285, 4
    %v287 = vadd.f32 %v285, %v286
    %v288 = vrot.slane %v287, 2
    %v289 = vadd.f32 %v287, %v288
    %v290 = vrot.slane %v289, 1
    %v291 = vadd.f32 %v289, %v290
    %293 = vset.pattern.permute.xlu0 0
    %294 = vperm.xlu0 %293, %v57
    %v295 = vpop.permute.xlu0 %294
    %v297 = vperm.slane %v295, 0
    %v298 = vadd.f32 %v291, %v297
    %v299 = vxor.u32 %v298, 2147483648
    %v300 = vmul.f32 %v299, 1.442695
    %v301 = vpow.pop %v300
    %v302 = vadd.f32 %v301, 1.0
    %v303 = vrcp.pop %v302
    %v304 = vmul.f32 %v302, %v303
    %v305 = vsub.f32 1.0, %v304
    %v306 = vmul.f32 %v303, %v305
    %v307 = vadd.f32 %v303, %v306
    %vm308 = vweird.f32 %v302
    %vm309 = vweird.f32 %v303
    %vm310 = vmor %vm308, %vm309
    %v311 = vsel %vm310, %v303, %v307
    %v312 = vand.u32 2147483647, %v302
    %vm313 = vcmp.eq.f32.partialorder %v312, 8.507059e+37
    %v314 = vand.u32 %v302, 2147483648
    %v315 = vor.u32 1.1754944e-38, %v314
    %v316 = vsel %vm313, %v315, %v311
    %v317 = vmul.f32 1.0, %v316
    %vm318 = vcmask 57344
    %319 = vst.msk [vmem:[#allocation3] sm:$0x1] %vm318, %v317
    // Predicated region
    $region30: #{binary_fcnn_forward.1} parent=1 // pred_check
      _
    $region31: #{binary_fcnn_forward.1} parent=1 // pred_check_branch
      %321 = sbr.rel (0) target = $region33
    $region32: #{binary_fcnn_forward.1} parent=1 // pred_region
      %323 = vsyncadd [#allocation4], 0
      %s325 = sshll.u32 [#allocation3], 4
      %s326 = int_to_ptr.vmem [resolvable:$true] %s325
      %s327 = sshll.u32 %s7, 4
      %s328 = int_to_ptr.hbm [resolvable:$true] %s327
      %330 = dma.vmem_to_hbm [thread:$0]  %s326, 16, %s328, [#allocation4]
    $region33: #{binary_fcnn_forward.1} parent=1 // pred_fallthru
      _
    // Predicated region
    $region34: #{binary_fcnn_forward.1} parent=1 // pred_check
      _
    $region35: #{binary_fcnn_forward.1} parent=1 // pred_check_branch
      %332 = sbr.rel (0) target = $region37
    $region36: #{binary_fcnn_forward.1} parent=1 // pred_region
      %334 = dma.done [#allocation4], 16
    $region37: #{binary_fcnn_forward.1} parent=1 // pred_fallthru
      _
    %335 = vsyncpa [#allocation4], 1

</llo_original>
